<compile_context>
chip_gen: v6e
topology: v6e:2x2x1
jax: 0.10.0
libtpu: 0.0.40
codegen_flags: <defaults>
</compile_context>

<pallas_src>
import functools

import jax
import jax.numpy as jnp
from jax.experimental import pallas as pl
from jax.experimental.pallas import tpu as pltpu

LANE = 128
SUBLANE = 8
TARGET_BLOCK_ROWS = 8192   # 8192 x 128 f32 = 4 MiB per input per grid step


def _bce_blur_kernel(pred_ref, true_ref, out_ref, *,
                     inv_alpha: float, n_last: int, needs_mask: bool):
    c = pl.program_id(0)           # "parallel" part (megacore split on v7x)
    i = pl.program_id(1)           # sequential reduction steps within a part

    @pl.when(i == 0)
    def _():
        out_ref[...] = jnp.zeros_like(out_ref)

    x = pred_ref[...].astype(jnp.float32)
    y = true_ref[...].astype(jnp.float32)

    # Numerically-stable BCE-with-logits.
    e = jnp.exp(-jnp.abs(x))
    bce = jnp.maximum(x, 0.0) - x * y + jnp.log1p(e)
    # sigmoid via a single exact EUP tanh (no f32 divide / Newton refinement).
    p = 0.5 * jnp.tanh(0.5 * x) + 0.5
    dx = p - y
    alpha_factor = 1.0 - jnp.exp((dx - 1.0) * inv_alpha)
    loss = bce * alpha_factor

    block_rows = loss.shape[0]

    def fold(vals):
        # (block_rows, 128) -> (1, 8, 128): sublane-group sum = plain vreg adds.
        return vals.reshape(block_rows // SUBLANE, SUBLANE, LANE).sum(axis=0)[None]

    if needs_mask:
        # Lane padding / partial-boundary garbage lives only in the globally
        # last block, so only that block pays for the iota compare/select.
        is_last = jnp.logical_and(c == pl.num_programs(0) - 1,
                                  i == pl.num_programs(1) - 1)

        @pl.when(is_last)
        def _():
            row = jax.lax.broadcasted_iota(jnp.int32, loss.shape, 0)
            lane = jax.lax.broadcasted_iota(jnp.int32, loss.shape, 1)
            keep = (row * LANE + lane) < n_last   # block-local: no i32 overflow
            out_ref[...] += fold(jnp.where(keep, loss, 0.0))

        @pl.when(jnp.logical_not(is_last))
        def _():
            out_ref[...] += fold(loss)
    else:
        out_ref[...] += fold(loss)


def bce_blur_with_logits_loss(pred, true, alpha: float = 0.05, *,
                              target_block_rows: int = TARGET_BLOCK_ROWS):
    assert pred.shape == true.shape
    n = pred.size
    assert n > 0

    flat_p = pred.reshape(-1)   # original dtype stays in HBM; cast in-kernel
    flat_t = true.reshape(-1)

    # Minimal padding: only up to a 128-lane multiple (needed for the 2-D
    # reshape), plus up to one (8,128) tile for sub-1KiB inputs.  Lane-aligned
    # element counts are never copied.
    rows = max(SUBLANE, pl.cdiv(n, LANE))
    pad = rows * LANE - n
    if pad:
        flat_p = jnp.pad(flat_p, (0, pad))
        flat_t = jnp.pad(flat_t, (0, pad))

    P = flat_p.reshape(rows, LANE)
    T = flat_t.reshape(rows, LANE)

    # Block rows: multiple of 8 and never larger than the array, so every
    # block *starts* in-bounds; only the globally-last block can be partial.
    block_rows = min(int(target_block_rows), (rows // SUBLANE) * SUBLANE)
    total_blocks = pl.cdiv(rows, block_rows)

    # Megacore-friendly leading axis: 2 parts only when they divide the block
    # count evenly (no clamped fully-OOB blocks) with >= 2 steps per part.
    num_parts = 2 if (total_blocks % 2 == 0 and total_blocks >= 4) else 1
    steps = total_blocks // num_parts

    # Valid elements inside the globally-last block (static, block-local).
    n_last = n - (total_blocks - 1) * block_rows * LANE
    needs_mask = n_last < block_rows * LANE

    kernel = functools.partial(
        _bce_blur_kernel,
        inv_alpha=1.0 / (float(alpha) + 1e-4),
        n_last=int(n_last),
        needs_mask=bool(needs_mask),
    )

    row_map = lambda c, i: (c * steps + i, 0)

    partials = pl.pallas_call(
        kernel,
        out_shape=jax.ShapeDtypeStruct((num_parts, SUBLANE, LANE), jnp.float32),
        grid_spec=pltpu.PrefetchScalarGridSpec(
            num_scalar_prefetch=0,
            grid=(num_parts, steps),
            in_specs=[
                pl.BlockSpec((block_rows, LANE), row_map),
                pl.BlockSpec((block_rows, LANE), row_map),
            ],
            out_specs=pl.BlockSpec((1, SUBLANE, LANE), lambda c, i: (c, 0, 0)),
        ),
        compiler_params=pltpu.CompilerParams(
            dimension_semantics=("parallel", "arbitrary"),
            vmem_limit_bytes=32 * 1024 * 1024,
        ),
    )(P, T)

    return jnp.sum(partials) / jnp.float32(n)


def _reference(pred, true, alpha=0.05):
    x = pred.astype(jnp.float32)
    y = true.astype(jnp.float32)
    bce = jnp.maximum(x, 0.0) - x * y + jnp.log1p(jnp.exp(-jnp.abs(x)))
    p = jax.nn.sigmoid(x)
    dx = p - y
    alpha_factor = 1.0 - jnp.exp((dx - 1.0) / (alpha + 1e-4))
    return jnp.mean(bce * alpha_factor)


if __name__ == "__main__":
    key = jax.random.PRNGKey(0)
    k1, k2, k3, k4, k5, k6 = jax.random.split(key, 6)

    # NCHW inputs as the PyTorch module would receive from a detection head.
    shape = (2, 4, 16, 16)
    pred = jax.random.normal(k1, shape, dtype=jnp.float32)
    true = (jax.random.uniform(k2, shape) > 0.5).astype(jnp.float32)
    out = jax.block_until_ready(bce_blur_with_logits_loss(pred, true, alpha=0.05))
    ref = _reference(pred, true, alpha=0.05)
    assert jnp.allclose(out, ref, atol=2e-5, rtol=1e-4), (out, ref)

    # Ragged size (not a multiple of 128): exercises the lane pad + tail mask.
    shape2 = (2, 3, 7, 11)
    pred2 = jax.random.normal(k3, shape2, dtype=jnp.float32)
    true2 = (jax.random.uniform(k4, shape2) > 0.5).astype(jnp.float32)
    out2 = jax.block_until_ready(bce_blur_with_logits_loss(pred2, true2, alpha=0.05))
    ref2 = _reference(pred2, true2, alpha=0.05)
    assert jnp.allclose(out2, ref2, atol=2e-5, rtol=1e-4), (out2, ref2)

    # Multi-step + 2-part grid + partial boundary block (small blocks forced
    # so the accumulation / megacore path is exercised at a small shape).
    shape3 = (2, 3, 64, 80)
    pred3 = jax.random.normal(k5, shape3, dtype=jnp.float32)
    true3 = (jax.random.uniform(k6, shape3) > 0.5).astype(jnp.float32)
    out3 = jax.block_until_ready(
        bce_blur_with_logits_loss(pred3, true3, alpha=0.05, target_block_rows=64))
    ref3 = _reference(pred3, true3, alpha=0.05)
    assert jnp.allclose(out3, ref3, atol=2e-5, rtol=1e-4), (out3, ref3)

    print("KERNEL_OK")
</pallas_src>

<mosaic_0001>
module attributes {stable_mosaic.version = 11 : i64} {
  func.func @_bce_blur_kernel(%arg0: i32, %arg1: i32, %arg2: memref<16x128xf32, #tpu.memory_space<vmem>>, %arg3: memref<16x128xf32, #tpu.memory_space<vmem>>, %arg4: memref<1x8x128xf32, #tpu.memory_space<vmem>>) attributes {dimension_semantics = [#tpu.dimension_semantics<parallel>, #tpu.dimension_semantics<arbitrary>], iteration_bounds = array<i64: 1, 1>, scalar_prefetch = 0 : i64, scratch_operands = 0 : i64, tpu.core_type = #tpu.core_type<tc>, window_params = [{transform_indices = @transform_0, window_bounds = array<i64: 16, 128>}, {transform_indices = @transform_1, window_bounds = array<i64: 16, 128>}, {transform_indices = @transform_2, window_bounds = array<i64: 1, 8, 128>}]} {
    %c0_i32 = arith.constant 0 : i32
    %0 = arith.cmpi eq, %arg1, %c0_i32 : i32
    %1 = arith.extui %0 : i1 to i32
    %c0_i32_0 = arith.constant 0 : i32
    %2 = arith.cmpi ne, %1, %c0_i32_0 : i32
    scf.if %2 {
      %cst_18 = arith.constant 0.000000e+00 : f32
      %37 = vector.broadcast %cst_18 : f32 to vector<1x8x128xf32>
      %c0_19 = arith.constant 0 : index
      %c0_20 = arith.constant 0 : index
      %c0_21 = arith.constant 0 : index
      %38 = vector.load %arg4[%c0_19, %c0_20, %c0_21] : memref<1x8x128xf32, #tpu.memory_space<vmem>>, vector<1x8x128xf32>
      tpu.vector_store %arg4[%c0_19, %c0_20, %c0_21], %37 {strides = array<i32>} : memref<1x8x128xf32, #tpu.memory_space<vmem>>, vector<1x8x128xf32>,
    } else {
    }
    %c0 = arith.constant 0 : index
    %c0_1 = arith.constant 0 : index
    %3 = vector.load %arg2[%c0, %c0_1] : memref<16x128xf32, #tpu.memory_space<vmem>>, vector<16x128xf32>
    %c0_2 = arith.constant 0 : index
    %c0_3 = arith.constant 0 : index
    %4 = vector.load %arg3[%c0_2, %c0_3] : memref<16x128xf32, #tpu.memory_space<vmem>>, vector<16x128xf32>
    %5 = math.absf %3 : vector<16x128xf32>
    %cst = arith.constant 0.000000e+00 : f32
    %6 = vector.broadcast %cst : f32 to vector<16x128xf32>
    %7 = arith.subf %6, %5 : vector<16x128xf32>
    %8 = math.exp %7 : vector<16x128xf32>
    %cst_4 = arith.constant 0.000000e+00 : f32
    %9 = vector.broadcast %cst_4 : f32 to vector<16x128xf32>
    %10 = arith.maximumf %3, %9 : vector<16x128xf32>
    %11 = arith.mulf %3, %4 : vector<16x128xf32>
    %12 = arith.subf %10, %11 : vector<16x128xf32>
    %13 = math.log1p %8 : vector<16x128xf32>
    %14 = arith.addf %12, %13 : vector<16x128xf32>
    %cst_5 = arith.constant 5.000000e-01 : f32
    %15 = vector.broadcast %cst_5 : f32 to vector<16x128xf32>
    %16 = arith.mulf %15, %3 : vector<16x128xf32>
    %17 = math.tanh %16 : vector<16x128xf32>
    %cst_6 = arith.constant 5.000000e-01 : f32
    %18 = vector.broadcast %cst_6 : f32 to vector<16x128xf32>
    %19 = arith.mulf %18, %17 : vector<16x128xf32>
    %cst_7 = arith.constant 5.000000e-01 : f32
    %20 = vector.broadcast %cst_7 : f32 to vector<16x128xf32>
    %21 = arith.addf %19, %20 : vector<16x128xf32>
    %22 = arith.subf %21, %4 : vector<16x128xf32>
    %cst_8 = arith.constant 1.000000e+00 : f32
    %23 = vector.broadcast %cst_8 : f32 to vector<16x128xf32>
    %24 = arith.subf %22, %23 : vector<16x128xf32>
    %cst_9 = arith.constant 19.9600792 : f32
    %25 = vector.broadcast %cst_9 : f32 to vector<16x128xf32>
    %26 = arith.mulf %24, %25 : vector<16x128xf32>
    %27 = math.exp %26 : vector<16x128xf32>
    %cst_10 = arith.constant 1.000000e+00 : f32
    %28 = vector.broadcast %cst_10 : f32 to vector<16x128xf32>
    %29 = arith.subf %28, %27 : vector<16x128xf32>
    %30 = arith.mulf %14, %29 : vector<16x128xf32>
    %c0_11 = arith.constant 0 : index
    %c0_12 = arith.constant 0 : index
    %c0_13 = arith.constant 0 : index
    %31 = vector.load %arg4[%c0_11, %c0_12, %c0_13] : memref<1x8x128xf32, #tpu.memory_space<vmem>>, vector<1x8x128xf32>
    %32 = vector.shape_cast %30 : vector<16x128xf32> to vector<2x8x128xf32>
    %cst_14 = arith.constant dense<0.000000e+00> : vector<8x128xf32>
    %33 = vector.multi_reduction <add>, %32, %cst_14 [0] : vector<2x8x128xf32> to vector<8x128xf32>
    %34 = vector.shape_cast %33 : vector<8x128xf32> to vector<1x8x128xf32>
    %35 = arith.addf %31, %34 : vector<1x8x128xf32>
    %c0_15 = arith.constant 0 : index
    %c0_16 = arith.constant 0 : index
    %c0_17 = arith.constant 0 : index
    %36 = vector.load %arg4[%c0_15, %c0_16, %c0_17] : memref<1x8x128xf32, #tpu.memory_space<vmem>>, vector<1x8x128xf32>
    tpu.vector_store %arg4[%c0_15, %c0_16, %c0_17], %35 {strides = array<i32>} : memref<1x8x128xf32, #tpu.memory_space<vmem>>, vector<1x8x128xf32>,
    return
  }
  func.func @transform_0(%arg0: i32, %arg1: i32) -> (i32, i32) {
    %c1_i32 = arith.constant 1 : i32
    %0 = arith.muli %arg0, %c1_i32 : i32
    %1 = arith.addi %0, %arg1 : i32
    %c0_i32 = arith.constant 0 : i32
    %c0_i32_0 = arith.constant 0 : i32
    return %1, %c0_i32 : i32, i32
  }
  func.func @transform_1(%arg0: i32, %arg1: i32) -> (i32, i32) {
    %c1_i32 = arith.constant 1 : i32
    %0 = arith.muli %arg0, %c1_i32 : i32
    %1 = arith.addi %0, %arg1 : i32
    %c0_i32 = arith.constant 0 : i32
    %c0_i32_0 = arith.constant 0 : i32
    return %1, %c0_i32 : i32, i32
  }
  func.func @transform_2(%arg0: i32, %arg1: i32) -> (i32, i32, i32) {
    %c0_i32 = arith.constant 0 : i32
    %c0_i32_0 = arith.constant 0 : i32
    %c0_i32_1 = arith.constant 0 : i32
    return %arg0, %c0_i32, %c0_i32_0 : i32, i32, i32
  }
}

</mosaic_0001>

<llo_original>
// kernel: tpu_custom_call.1
$region0: #{tpu_custom_call.1}
  #allocation0 [shape = 'u32[]', space=smem, size = 0x4, offset = 0x4, fixed_abs, tag = 'smem constant byte address 0x4 - core index']
  #allocation1 [shape = 'u32[144,128]{1,0:T(1,128)}', space=vmem, size = 0x12000, scoped, tag = 'internal scratch']
  %s0 = inlined_call_operand.hbm [shape: f32[16,128], index: 0, kind: input, shape index: {}]
  %s1 = inlined_call_operand.hbm [shape: f32[16,128], index: 1, kind: input, shape index: {}]
  %s2 = inlined_call_operand.hbm [shape: f32[1,8,128], index: 2, kind: output, shape index: {}]
  %s3 = sld [smem:[#allocation0]]
  $region30: #{tpu_custom_call.1} parent=0
    _
  %s5 = ssub.s32 1, %s3
  %s6 = scalar_select 0, %s5, %s3
  $region1: #{tpu_custom_call.1} parent=0
    #allocation2 [shape = 'u8[8192]{0}', space=vmem, size = 0x2000, scoped, tag = 'input window, operand 0, single buffered']
    #allocation3 [shape = 's32[1]{0}', space=sflag, size = 0x4, scoped, tag = 'scoped memory for tpu_custom_call.1']
    #allocation4 [shape = 's32[1]{0}', space=sflag, size = 0x4, scoped, tag = 'scoped memory for tpu_custom_call.1']
    #allocation5 [shape = 'u8[8192]{0}', space=vmem, size = 0x2000, scoped, tag = 'input window, operand 1, single buffered']
    #allocation6 [shape = 's32[1]{0}', space=sflag, size = 0x4, scoped, tag = 'scoped memory for tpu_custom_call.1']
    #allocation7 [shape = 'u8[4096]{0}', space=vmem, size = 0x1000, scoped, tag = 'output window, operand 0, single buffered']
    %7 = vsyncpa [#allocation3], 0
    %8 = vsyncpa [#allocation6], 0
    %9 = vsyncpa [#allocation4], 0
    // Predicated region
    $region2: #{tpu_custom_call.1} parent=1 // pred_check
      _
    $region3: #{tpu_custom_call.1} parent=1 // pred_check_branch
      %11 = sbr.rel (0) target = $region5
    $region4: #{tpu_custom_call.1} parent=1 // pred_region
      %s12 = sadd.s32 0, 0
      %s13 = smul.u32 2, %s12
      %s15 = ssub.s32 256, 256
      %16 = vsyncadd [#allocation3], %s15
      %s17 = smul.addr %s13, 128
      %s18 = scalar_lea.hbm %s0, %s17
      %s19 = sshll.u32 [#allocation2], 4
      %s20 = int_to_ptr.vmem [resolvable:$true] %s19
      %25 = dma.hbm_to_vmem [thread:$0]  %s18, 256, %s20, [#allocation3], 128, 128, 8
    $region5: #{tpu_custom_call.1} parent=1 // pred_fallthru
      _
    // Predicated region
    $region6: #{tpu_custom_call.1} parent=1 // pred_check
      _
    $region7: #{tpu_custom_call.1} parent=1 // pred_check_branch
      %27 = sbr.rel (0) target = $region9
    $region8: #{tpu_custom_call.1} parent=1 // pred_region
      %s28 = sadd.s32 0, 0
      %s29 = smul.u32 2, %s28
      %s31 = ssub.s32 256, 256
      %32 = vsyncadd [#allocation6], %s31
      %s33 = smul.addr %s29, 128
      %s34 = scalar_lea.hbm %s1, %s33
      %s35 = sshll.u32 [#allocation5], 4
      %s36 = int_to_ptr.vmem [resolvable:$true] %s35
      %41 = dma.hbm_to_vmem [thread:$0]  %s34, 256, %s36, [#allocation6], 128, 128, 8
    $region9: #{tpu_custom_call.1} parent=1 // pred_fallthru
      _
    // Predicated region
    $region10: #{tpu_custom_call.1} parent=1 // pred_check
      _
    $region11: #{tpu_custom_call.1} parent=1 // pred_check_branch
      %43 = sbr.rel (0) target = $region13
    $region12: #{tpu_custom_call.1} parent=1 // pred_region
      %44 = dma.done [#allocation3], 256
    $region13: #{tpu_custom_call.1} parent=1 // pred_fallthru
      _
    // Predicated region
    $region14: #{tpu_custom_call.1} parent=1 // pred_check
      _
    $region15: #{tpu_custom_call.1} parent=1 // pred_check_branch
      %46 = sbr.rel (0) target = $region17
    $region16: #{tpu_custom_call.1} parent=1 // pred_region
      %47 = dma.done [#allocation6], 256
    $region17: #{tpu_custom_call.1} parent=1 // pred_fallthru
      _
    %s48 = sadd.s32 0, 0
    %s49 = smul.u32 2, %s48
    %s50 = sadd.s32 0, 0
    %s51 = smul.u32 2, %s50
    %p52 = scmp.eq.s32.totalorder 0, 0
    // Predicated region
    $region18: #{tpu_custom_call.1} parent=1 // pred_check
      %p53 = pneg %p52
    $region19: #{tpu_custom_call.1} parent=1 // pred_check_branch
      %55 = sbr.rel (%p53) target = $region21
    $region20: #{tpu_custom_call.1} parent=1 // pred_region
      %56 = vst [vmem:[#allocation7] sm:$0xff] 0.0
    $region21: #{tpu_custom_call.1} parent=1 // pred_fallthru
      _
    %v57 = vld [vmem:[#allocation2] sm:$0xff]
    %v58 = vld [vmem:[#allocation2 + $0x8] sm:$0xff]
    %v59 = vld [vmem:[#allocation5] sm:$0xff]
    %v60 = vld [vmem:[#allocation5 + $0x8] sm:$0xff]
    %v61 = vand.u32 2147483647, %v57
    %v62 = vand.u32 2147483647, %v58
    %v63 = vsub.f32 0.0, %v61
    %v64 = vsub.f32 0.0, %v62
    %v65 = vmul.f32 %v63, 1.442695
    %v66 = vpow.pop %v65
    %v67 = vmul.f32 %v64, 1.442695
    %v68 = vpow.pop %v67
    %v69 = vmax.f32 %v57, 0.0
    %v70 = vmax.f32 %v58, 0.0
    %v71 = vmul.f32 %v57, %v59
    %v72 = vmul.f32 %v58, %v60
    %v73 = vsub.f32 %v69, %v71
    %v74 = vsub.f32 %v70, %v72
    %v75 = vadd.f32 %v66, 1.0
    %v76 = vlog2.pop %v75
    %v77 = vmul.f32 %v76, 0.6931472
    %v78 = vmul.f32 -0.5, %v66
    %v79 = vadd.f32 %v78, 1.0
    %v80 = vmul.f32 %v79, %v66
    %v81 = vand.u32 2147483647, %v66
    %vm82 = vcmp.lt.f32.partialorder %v81, 0.0004427343
    %v83 = vsel %vm82, %v80, %v77
    %v84 = vadd.f32 %v68, 1.0
    %v85 = vlog2.pop %v84
    %v86 = vmul.f32 %v85, 0.6931472
    %v87 = vmul.f32 -0.5, %v68
    %v88 = vadd.f32 %v87, 1.0
    %v89 = vmul.f32 %v88, %v68
    %v90 = vand.u32 2147483647, %v68
    %vm91 = vcmp.lt.f32.partialorder %v90, 0.0004427343
    %v92 = vsel %vm91, %v89, %v86
    %v93 = vadd.f32 %v73, %v83
    %v94 = vadd.f32 %v74, %v92
    %v95 = vmul.f32 %v57, 0.5
    %v96 = vmul.f32 %v58, 0.5
    %v97 = vtanh.pop %v95
    %v98 = vtanh.pop %v96
    %v99 = vmul.f32 %v97, 0.5
    %v100 = vmul.f32 %v98, 0.5
    %v101 = vadd.f32 %v99, 0.5
    %v102 = vadd.f32 %v100, 0.5
    %v103 = vsub.f32 %v101, %v59
    %v104 = vsub.f32 %v102, %v60
    %v105 = vsub.f32 %v103, 1.0
    %v106 = vsub.f32 %v104, 1.0
    %v107 = vmul.f32 %v105, 19.96008
    %v108 = vmul.f32 %v106, 19.96008
    %v109 = vmul.f32 %v107, 1.442695
    %v110 = vpow.pop %v109
    %v111 = vmul.f32 %v108, 1.442695
    %v112 = vpow.pop %v111
    %v113 = vsub.f32 1.0, %v110
    %v114 = vsub.f32 1.0, %v112
    %v115 = vmul.f32 %v93, %v113
    %v116 = vmul.f32 %v94, %v114
    %v117 = vld [vmem:[#allocation7] sm:$0xff]
    %v118 = vadd.f32 %v115, %v116
    %v119 = vadd.f32 %v117, %v118
    %120 = vst [vmem:[#allocation7] sm:$0xff] %v119
    // Predicated region
    $region22: #{tpu_custom_call.1} parent=1 // pred_check
      _
    $region23: #{tpu_custom_call.1} parent=1 // pred_check_branch
      %122 = sbr.rel (0) target = $region25
    $region24: #{tpu_custom_call.1} parent=1 // pred_region
      %s124 = ssub.s32 128, 128
      %125 = vsyncadd [#allocation4], %s124
      %s127 = sshll.u32 [#allocation7], 4
      %s128 = int_to_ptr.vmem [resolvable:$true] %s127
      %130 = dma.vmem_to_hbm [thread:$0]  %s128, 128, %s2, [#allocation4]
    $region25: #{tpu_custom_call.1} parent=1 // pred_fallthru
      _
    // Predicated region
    $region26: #{tpu_custom_call.1} parent=1 // pred_check
      _
    $region27: #{tpu_custom_call.1} parent=1 // pred_check_branch
      %132 = sbr.rel (0) target = $region29
    $region28: #{tpu_custom_call.1} parent=1 // pred_region
      %133 = dma.done [#allocation4], 128
    $region29: #{tpu_custom_call.1} parent=1 // pred_fallthru
      _
    %134 = vsyncpa [#allocation3], 1
    %135 = vsyncpa [#allocation6], 1
    %136 = vsyncpa [#allocation4], 1

</llo_original>
